<compile_context>
chip_gen: v5e
topology: v5e:2x2
jax: 0.10.0
libtpu: 0.0.40
codegen_flags: <defaults>
</compile_context>

<pallas_src>
import functools

import jax
import jax.numpy as jnp
from jax.experimental import pallas as pl
from jax.experimental.pallas import tpu as pltpu

_LANE = 128
_SUBLANE = 8


def _round_up(n, m):
    return ((n + m - 1) // m) * m


def _mlp_kernel(x_ref, w1_ref, b1_ref, w2_ref, b2_ref, w3_ref, b3_ref, o_ref):
    """Fused sigmoid(relu(relu(x@W1+b1)@W2+b2)@W3+b3) on one row tile.

    MXU inputs use the weight dtype (bf16 by default); accumulation, bias add,
    ReLU and sigmoid are always f32.
    """
    cdt = w1_ref.dtype
    x = x_ref[...].astype(cdt)

    # Layer 1: Linear(input -> hidden) + ReLU
    h1 = jnp.dot(x, w1_ref[...], preferred_element_type=jnp.float32) + b1_ref[...]
    h1 = jnp.maximum(h1, 0.0)

    # Layer 2: Linear(hidden -> hidden // 2) + ReLU
    h2 = jnp.dot(h1.astype(cdt), w2_ref[...], preferred_element_type=jnp.float32) + b2_ref[...]
    h2 = jnp.maximum(h2, 0.0)

    # Layer 3: Linear(hidden // 2 -> output) + sigmoid (last_layer_activation)
    h3 = jnp.dot(h2.astype(cdt), w3_ref[...], preferred_element_type=jnp.float32) + b3_ref[...]
    o_ref[...] = jax.nn.sigmoid(h3).astype(o_ref.dtype)


def prepare_padded_params(params, compute_dtype=jnp.bfloat16):
    """Pad/cast weights ONCE, outside the per-call path (cache the result).

    Only the hidden (lane) dims are zero-padded to multiples of 128; the small
    input dim (K of layer 1) and output dim (N of layer 3) keep their true
    widths so x / out never get lane-padded in HBM.  Zero padding is
    mathematically inert (zero rows/cols/bias, ReLU keeps padded lanes at 0).
    Biases stay f32 so bias-add / ReLU / sigmoid are exact f32.
    """
    w1, b1 = params["w1"], params["b1"]
    w2, b2 = params["w2"], params["b2"]
    w3, b3 = params["w3"], params["b3"]

    in_f, H = w1.shape
    H2 = w2.shape[1]
    out_f = w3.shape[1]
    # TODO(synk): round hidden dims to 256 on v6e/v7x (2x256x256 MXU) when H is large.
    H_p, H2_p = _round_up(H, _LANE), _round_up(H2, _LANE)

    f32 = jnp.float32
    cdt = compute_dtype
    w1p = jnp.zeros((in_f, H_p), cdt).at[:, :H].set(w1.astype(cdt))
    b1p = jnp.zeros((1, H_p), f32).at[:, :H].set(b1.astype(f32))
    w2p = jnp.zeros((H_p, H2_p), cdt).at[:H, :H2].set(w2.astype(cdt))
    b2p = jnp.zeros((1, H2_p), f32).at[:, :H2].set(b2.astype(f32))
    w3p = jnp.zeros((H2_p, out_f), cdt).at[:H2, :].set(w3.astype(cdt))
    b3p = b3.astype(f32).reshape(1, out_f)

    return {"w1": w1p, "b1": b1p, "w2": w2p, "b2": b2p, "w3": w3p, "b3": b3p}


@functools.partial(jax.jit, static_argnames=("block_rows",))
def simple_mlp_forward(x, padded_params, block_rows=1024):
    """Runs the fused MLP kernel.

    x: [batch, *, input_features]
    padded_params: output of prepare_padded_params (weights already [in, out]).
    """
    w1p, b1p = padded_params["w1"], padded_params["b1"]
    w2p, b2p = padded_params["w2"], padded_params["b2"]
    w3p, b3p = padded_params["w3"], padded_params["b3"]

    in_f, H_p = w1p.shape
    H2_p = w2p.shape[1]
    out_f = w3p.shape[1]

    # ---- flatten [batch, *, in] -> [rows, in] ------------------------------
    lead_shape = x.shape[:-1]
    x2d = x.reshape(-1, in_f)
    n_rows = x2d.shape[0]

    # ---- row tiling (static under jit) -------------------------------------
    block_rows = _round_up(max(int(block_rows), _SUBLANE), _SUBLANE)
    rows_aligned = _round_up(n_rows, _SUBLANE)
    # Force >= 2 grid steps when the batch allows so ("parallel",) shards rows
    # across both TensorCores on v7x; otherwise keep tiles big to amortize the
    # ~0.35us per-grid-step overhead.
    two_way = _round_up(max(pl.cdiv(rows_aligned, 2), _SUBLANE), _SUBLANE)
    block_rows_eff = min(block_rows, two_way)
    rows_p = _round_up(n_rows, block_rows_eff)
    grid = (rows_p // block_rows_eff,)

    if rows_p != n_rows:  # ragged batch: zero-pad rows only (never lanes)
        x2d = jnp.pad(x2d, ((0, rows_p - n_rows), (0, 0)))

    # ---- block specs: row-tiled activations, resident single-buffered weights
    x_spec = pl.BlockSpec((block_rows_eff, in_f), lambda i: (i, 0))
    o_spec = pl.BlockSpec((block_rows_eff, out_f), lambda i: (i, 0))

    def _const_spec(arr):
        # Constant index map -> resident across grid steps; Buffered(1) drops
        # the pointless second buffer (halves weight VMEM footprint).
        try:
            return pl.BlockSpec(arr.shape, lambda i: (0,) * arr.ndim,
                                pipeline_mode=pl.Buffered(1))
        except TypeError:  # BlockSpec without pipeline_mode support
            return pl.BlockSpec(arr.shape, lambda i: (0,) * arr.ndim)

    # ---- generation-aware VMEM budget --------------------------------------
    try:
        vmem_cap = int(getattr(pltpu.get_tpu_info(), "vmem_capacity_bytes", 64 * 2**20))
    except Exception:
        vmem_cap = 64 * 2**20                 # conservative: v7x per-TC VMEM
    vmem_cap_budget = (vmem_cap * 3) // 4     # headroom for compiler scratch

    bpe_w = w1p.dtype.itemsize
    bpe_x = x.dtype.itemsize
    in_l, out_l = _round_up(in_f, _LANE), _round_up(out_f, _LANE)  # VMEM lane pad
    weight_bytes = ((w1p.size + w2p.size + w3p.size) * bpe_w
                    + (b1p.size + b2p.size + b3p.size) * 4)        # single-buffered
    io_bytes = 2 * block_rows_eff * (in_l + out_l) * bpe_x         # double-buffered tiles
    interm_bytes = block_rows_eff * (H_p + H2_p) * 4               # h1/h2 f32 values
    vmem_needed = weight_bytes + io_bytes + interm_bytes
    vmem_limit = int(min(vmem_cap_budget, max(2 * vmem_needed, 16 * 2**20)))
    # TODO(synk): K-tile the hidden dims (extra grid axis + f32 accumulator with
    # pl.when init/finalize) if resident weights ever exceed the v7x budget.

    # ---- advisory cost estimate (actual HBM traffic) ------------------------
    cost = pl.CostEstimate(
        flops=2 * n_rows * (in_f * H_p + H_p * H2_p + H2_p * out_f),
        transcendentals=n_rows * out_f,
        bytes_accessed=n_rows * (in_f + out_f) * bpe_x + weight_bytes,
    )

    out2d = pl.pallas_call(
        _mlp_kernel,
        out_shape=jax.ShapeDtypeStruct((rows_p, out_f), x.dtype),
        grid_spec=pltpu.PrefetchScalarGridSpec(
            num_scalar_prefetch=0,
            grid=grid,
            in_specs=[
                x_spec,
                _const_spec(w1p), _const_spec(b1p),
                _const_spec(w2p), _const_spec(b2p),
                _const_spec(w3p), _const_spec(b3p),
            ],
            out_specs=o_spec,
        ),
        compiler_params=pltpu.CompilerParams(
            dimension_semantics=("parallel",),
            vmem_limit_bytes=vmem_limit,
        ),
        cost_estimate=cost,
    )(x2d, w1p, b1p, w2p, b2p, w3p, b3p)

    if rows_p != n_rows:
        out2d = out2d[:n_rows]
    return out2d.reshape(*lead_shape, out_f)


def init_params(key, input_size, output_size, hidden_size=128):
    """Deterministic init mimicking nn.Linear (weights stored as [in, out])."""
    k1, k2, k3, k4, k5, k6 = jax.random.split(key, 6)

    def uniform_init(k, shape, fan_in):
        bound = 1.0 / jnp.sqrt(fan_in)
        return jax.random.uniform(k, shape, jnp.float32, -bound, bound)

    h2 = hidden_size // 2
    return {
        "w1": uniform_init(k1, (input_size, hidden_size), input_size),
        "b1": uniform_init(k2, (1, hidden_size), input_size),
        "w2": uniform_init(k3, (hidden_size, h2), hidden_size),
        "b2": uniform_init(k4, (1, h2), hidden_size),
        "w3": uniform_init(k5, (h2, output_size), h2),
        "b3": uniform_init(k6, (1, output_size), h2),
    }


def _reference_forward(x, params):
    """Pure-JAX reference for correctness checking."""
    h = jnp.maximum(x @ params["w1"] + params["b1"][0], 0.0)
    h = jnp.maximum(h @ params["w2"] + params["b2"][0], 0.0)
    h = h @ params["w3"] + params["b3"][0]
    return jax.nn.sigmoid(h)


if __name__ == "__main__":
    key = jax.random.PRNGKey(0)
    k_param, k_x = jax.random.split(key)

    input_size, output_size, hidden_size = 16, 4, 32
    params = init_params(k_param, input_size, output_size, hidden_size)

    # x: [batch, *, input_features] -> [2, 4, 16]
    x = jax.random.normal(k_x, (2, 4, input_size), dtype=jnp.float32)
    ref = _reference_forward(x, params)

    # Default fast path: bf16 MXU inputs, f32 accumulation (pad/cast once, cached).
    padded_bf16 = prepare_padded_params(params, compute_dtype=jnp.bfloat16)
    out = jax.block_until_ready(simple_mlp_forward(x, padded_bf16))
    assert out.shape == (2, 4, output_size), out.shape
    assert jnp.allclose(out, ref, atol=2e-2, rtol=2e-2), "bf16 path mismatch vs reference"

    # Exact f32 path.
    padded_f32 = prepare_padded_params(params, compute_dtype=jnp.float32)
    out32 = jax.block_until_ready(simple_mlp_forward(x, padded_f32))
    assert jnp.allclose(out32, ref, atol=1e-5, rtol=1e-5), "f32 path mismatch vs reference"

    # Ragged (non-divisible) batch: exercises row zero-padding and a 2-step grid.
    x2 = jax.random.normal(jax.random.PRNGKey(7), (3, 5, input_size), dtype=jnp.float32)
    out2 = jax.block_until_ready(simple_mlp_forward(x2, padded_f32, block_rows=64))
    assert jnp.allclose(out2, _reference_forward(x2, params), atol=1e-5, rtol=1e-5)

    print("KERNEL_OK")
</pallas_src>

<mosaic_0001>
module attributes {stable_mosaic.version = 11 : i64} {
  func.func @_mlp_kernel(%arg0: i32, %arg1: memref<8x16xf32, #tpu.memory_space<vmem>>, %arg2: memref<16x128xbf16, #tpu.memory_space<vmem>>, %arg3: memref<1x128xf32, #tpu.memory_space<vmem>>, %arg4: memref<128x128xbf16, #tpu.memory_space<vmem>>, %arg5: memref<1x128xf32, #tpu.memory_space<vmem>>, %arg6: memref<128x4xbf16, #tpu.memory_space<vmem>>, %arg7: memref<1x4xf32, #tpu.memory_space<vmem>>, %arg8: memref<8x4xf32, #tpu.memory_space<vmem>>) attributes {dimension_semantics = [#tpu.dimension_semantics<parallel>], iteration_bounds = array<i64: 1>, scalar_prefetch = 0 : i64, scratch_operands = 0 : i64, tpu.core_type = #tpu.core_type<tc>, window_params = [{transform_indices = @transform_0, window_bounds = array<i64: 8, 16>}, {pipeline_mode = #tpu.pipeline_mode<synchronous>, transform_indices = @transform_1, window_bounds = array<i64: 16, 128>}, {pipeline_mode = #tpu.pipeline_mode<synchronous>, transform_indices = @transform_2, window_bounds = array<i64: 1, 128>}, {pipeline_mode = #tpu.pipeline_mode<synchronous>, transform_indices = @transform_3, window_bounds = array<i64: 128, 128>}, {pipeline_mode = #tpu.pipeline_mode<synchronous>, transform_indices = @transform_4, window_bounds = array<i64: 1, 128>}, {pipeline_mode = #tpu.pipeline_mode<synchronous>, transform_indices = @transform_5, window_bounds = array<i64: 128, 4>}, {pipeline_mode = #tpu.pipeline_mode<synchronous>, transform_indices = @transform_6, window_bounds = array<i64: 1, 4>}, {transform_indices = @transform_7, window_bounds = array<i64: 8, 4>}]} {
    %c0 = arith.constant 0 : index
    %c0_0 = arith.constant 0 : index
    %0 = vector.load %arg1[%c0, %c0_0] : memref<8x16xf32, #tpu.memory_space<vmem>>, vector<8x16xf32>
    %1 = arith.truncf %0 : vector<8x16xf32> to vector<8x16xbf16>
    %c0_1 = arith.constant 0 : index
    %c0_2 = arith.constant 0 : index
    %2 = vector.load %arg2[%c0_1, %c0_2] : memref<16x128xbf16, #tpu.memory_space<vmem>>, vector<16x128xbf16>
    %cst = arith.constant dense<0.000000e+00> : vector<8x128xf32>
    %3 = tpu.matmul %1, %2, %cst {dimension_numbers = #tpu.dot_dimension_numbers<[1], [0], [0], [1], [0, 0, 1, 1], [], []>} : vector<8x16xbf16>, vector<16x128xbf16>, vector<8x128xf32> -> vector<8x128xf32>
    %c0_3 = arith.constant 0 : index
    %c0_4 = arith.constant 0 : index
    %4 = vector.load %arg3[%c0_3, %c0_4] : memref<1x128xf32, #tpu.memory_space<vmem>>, vector<1x128xf32>
    %5 = vector.broadcast %4 : vector<1x128xf32> to vector<8x128xf32>
    %6 = arith.addf %3, %5 : vector<8x128xf32>
    %cst_5 = arith.constant 0.000000e+00 : f32
    %7 = vector.broadcast %cst_5 : f32 to vector<8x128xf32>
    %8 = arith.maximumf %6, %7 : vector<8x128xf32>
    %9 = arith.truncf %8 : vector<8x128xf32> to vector<8x128xbf16>
    %c0_6 = arith.constant 0 : index
    %c0_7 = arith.constant 0 : index
    %10 = vector.load %arg4[%c0_6, %c0_7] : memref<128x128xbf16, #tpu.memory_space<vmem>>, vector<128x128xbf16>
    %cst_8 = arith.constant dense<0.000000e+00> : vector<8x128xf32>
    %11 = tpu.matmul %9, %10, %cst_8 {dimension_numbers = #tpu.dot_dimension_numbers<[1], [0], [0], [1], [0, 0, 1, 1], [], []>} : vector<8x128xbf16>, vector<128x128xbf16>, vector<8x128xf32> -> vector<8x128xf32>
    %c0_9 = arith.constant 0 : index
    %c0_10 = arith.constant 0 : index
    %12 = vector.load %arg5[%c0_9, %c0_10] : memref<1x128xf32, #tpu.memory_space<vmem>>, vector<1x128xf32>
    %13 = vector.broadcast %12 : vector<1x128xf32> to vector<8x128xf32>
    %14 = arith.addf %11, %13 : vector<8x128xf32>
    %cst_11 = arith.constant 0.000000e+00 : f32
    %15 = vector.broadcast %cst_11 : f32 to vector<8x128xf32>
    %16 = arith.maximumf %14, %15 : vector<8x128xf32>
    %17 = arith.truncf %16 : vector<8x128xf32> to vector<8x128xbf16>
    %c0_12 = arith.constant 0 : index
    %c0_13 = arith.constant 0 : index
    %18 = vector.load %arg6[%c0_12, %c0_13] : memref<128x4xbf16, #tpu.memory_space<vmem>>, vector<128x4xbf16>
    %cst_14 = arith.constant dense<0.000000e+00> : vector<8x4xf32>
    %19 = tpu.matmul %17, %18, %cst_14 {dimension_numbers = #tpu.dot_dimension_numbers<[1], [0], [0], [1], [0, 0, 1, 1], [], []>} : vector<8x128xbf16>, vector<128x4xbf16>, vector<8x4xf32> -> vector<8x4xf32>
    %c0_15 = arith.constant 0 : index
    %c0_16 = arith.constant 0 : index
    %20 = vector.load %arg7[%c0_15, %c0_16] : memref<1x4xf32, #tpu.memory_space<vmem>>, vector<1x4xf32>
    %21 = vector.broadcast %20 : vector<1x4xf32> to vector<8x4xf32>
    %22 = arith.addf %19, %21 : vector<8x4xf32>
    %23 = arith.negf %22 : vector<8x4xf32>
    %24 = math.exp %23 : vector<8x4xf32>
    %cst_17 = arith.constant 1.000000e+00 : f32
    %25 = vector.broadcast %cst_17 : f32 to vector<8x4xf32>
    %26 = arith.addf %25, %24 : vector<8x4xf32>
    %27 = arith.divf %25, %26 : vector<8x4xf32>
    %c0_18 = arith.constant 0 : index
    %c0_19 = arith.constant 0 : index
    %28 = vector.load %arg8[%c0_18, %c0_19] : memref<8x4xf32, #tpu.memory_space<vmem>>, vector<8x4xf32>
    tpu.vector_store %arg8[%c0_18, %c0_19], %27 {strides = array<i32>} : memref<8x4xf32, #tpu.memory_space<vmem>>, vector<8x4xf32>,
    return
  }
  func.func @transform_0(%arg0: i32) -> (i32, i32) {
    %c0_i32 = arith.constant 0 : i32
    %c0_i32_0 = arith.constant 0 : i32
    return %arg0, %c0_i32 : i32, i32
  }
  func.func @transform_1(%arg0: i32) -> (i32, i32) {
    %c0_i32 = arith.constant 0 : i32
    %c0_i32_0 = arith.constant 0 : i32
    %c0_i32_1 = arith.constant 0 : i32
    return %c0_i32, %c0_i32_0 : i32, i32
  }
  func.func @transform_2(%arg0: i32) -> (i32, i32) {
    %c0_i32 = arith.constant 0 : i32
    %c0_i32_0 = arith.constant 0 : i32
    %c0_i32_1 = arith.constant 0 : i32
    return %c0_i32, %c0_i32_0 : i32, i32
  }
  func.func @transform_3(%arg0: i32) -> (i32, i32) {
    %c0_i32 = arith.constant 0 : i32
    %c0_i32_0 = arith.constant 0 : i32
    %c0_i32_1 = arith.constant 0 : i32
    return %c0_i32, %c0_i32_0 : i32, i32
  }
  func.func @transform_4(%arg0: i32) -> (i32, i32) {
    %c0_i32 = arith.constant 0 : i32
    %c0_i32_0 = arith.constant 0 : i32
    %c0_i32_1 = arith.constant 0 : i32
    return %c0_i32, %c0_i32_0 : i32, i32
  }
  func.func @transform_5(%arg0: i32) -> (i32, i32) {
    %c0_i32 = arith.constant 0 : i32
    %c0_i32_0 = arith.constant 0 : i32
    %c0_i32_1 = arith.constant 0 : i32
    return %c0_i32, %c0_i32_0 : i32, i32
  }
  func.func @transform_6(%arg0: i32) -> (i32, i32) {
    %c0_i32 = arith.constant 0 : i32
    %c0_i32_0 = arith.constant 0 : i32
    %c0_i32_1 = arith.constant 0 : i32
    return %c0_i32, %c0_i32_0 : i32, i32
  }
  func.func @transform_7(%arg0: i32) -> (i32, i32) {
    %c0_i32 = arith.constant 0 : i32
    %c0_i32_0 = arith.constant 0 : i32
    return %arg0, %c0_i32 : i32, i32
  }
}

</mosaic_0001>

<llo_original>
// kernel: simple_mlp_forward.1
$region0: #{simple_mlp_forward.1}
  #allocation0 [shape = 'u32[]', space=smem, size = 0x4, offset = 0x4, fixed_abs, tag = 'smem constant byte address 0x4 - core index']
  #allocation1 [shape = 'u32[72,128]{1,0:T(1,128)}', space=vmem, size = 0x9000, scoped, tag = 'internal scratch']
  %s0 = inlined_call_operand.hbm [shape: f32[8,16], index: 0, kind: input, shape index: {}]
  %s1 = inlined_call_operand.hbm [shape: bf16[16,128], index: 1, kind: input, shape index: {}]
  %s2 = inlined_call_operand.vmem [shape: f32[1,128], index: 2, kind: input, shape index: {}]
  %s3 = inlined_call_operand.vmem [shape: bf16[128,128], index: 3, kind: input, shape index: {}]
  %s4 = inlined_call_operand.vmem [shape: f32[1,128], index: 4, kind: input, shape index: {}]
  %s5 = inlined_call_operand.vmem [shape: bf16[128,4], index: 5, kind: input, shape index: {}]
  %s6 = inlined_call_operand.vmem [shape: f32[1,4], index: 6, kind: input, shape index: {}]
  %s7 = inlined_call_operand.hbm [shape: f32[8,4], index: 7, kind: output, shape index: {}]
  %s8 = sld [smem:[#allocation0]]
  $region46: #{simple_mlp_forward.1} parent=0
    _
  %s10 = ssub.s32 1, %s8
  %s11 = scalar_select 0, %s10, %s8
  $region1: #{simple_mlp_forward.1} parent=0
    #allocation2 [shape = 'u8[4096]{0}', space=vmem, size = 0x1000, scoped, tag = 'input window, operand 0, single buffered']
    #allocation3 [shape = 's32[1]{0}', space=sflag, size = 0x4, scoped, tag = 'scoped memory for simple_mlp_forward.1']
    #allocation4 [shape = 's32[1]{0}', space=sflag, size = 0x4, scoped, tag = 'scoped memory for simple_mlp_forward.1']
    #allocation5 [shape = 'u8[4096]{0}', space=vmem, size = 0x1000, scoped, tag = 'input window, operand 1, single buffered']
    #allocation6 [shape = 's32[1]{0}', space=sflag, size = 0x4, scoped, tag = 'scoped memory for simple_mlp_forward.1']
    #allocation7 [shape = 'u8[4096]{0}', space=vmem, size = 0x1000, scoped, tag = 'output window, operand 0, single buffered']
    %12 = vsyncpa [#allocation3], 0
    %13 = vsyncpa [#allocation6], 0
    %14 = vsyncpa [#allocation4], 0
    // Predicated region
    $region2: #{simple_mlp_forward.1} parent=1 // pred_check
      _
    $region3: #{simple_mlp_forward.1} parent=1 // pred_check_branch
      %16 = sbr.rel (0) target = $region5
    $region4: #{simple_mlp_forward.1} parent=1 // pred_region
      %18 = vsyncadd [#allocation3], 0
      %s20 = sshll.u32 %s0, 4
      %s21 = int_to_ptr.hbm [resolvable:$true] %s20
      %s22 = sshll.u32 [#allocation2], 4
      %s23 = int_to_ptr.vmem [resolvable:$true] %s22
      %25 = dma.hbm_to_vmem [thread:$0]  %s21, 128, %s23, [#allocation3]
    $region5: #{simple_mlp_forward.1} parent=1 // pred_fallthru
      _
    // Predicated region
    $region6: #{simple_mlp_forward.1} parent=1 // pred_check
      _
    $region7: #{simple_mlp_forward.1} parent=1 // pred_check_branch
      %27 = sbr.rel (0) target = $region9
    $region8: #{simple_mlp_forward.1} parent=1 // pred_region
      %29 = vsyncadd [#allocation6], 0
      %s30 = sshll.u32 %s1, 4
      %s31 = int_to_ptr.hbm [resolvable:$true] %s30
      %s32 = sshll.u32 [#allocation5], 4
      %s33 = int_to_ptr.vmem [resolvable:$true] %s32
      %38 = dma.hbm_to_vmem [thread:$0]  %s31, 128, %s33, [#allocation6], 64, 64, 4
    $region9: #{simple_mlp_forward.1} parent=1 // pred_fallthru
      _
    // Predicated region
    $region10: #{simple_mlp_forward.1} parent=1 // pred_check
      _
    $region11: #{simple_mlp_forward.1} parent=1 // pred_check_branch
      %40 = sbr.rel (0) target = $region13
    $region12: #{simple_mlp_forward.1} parent=1 // pred_region
      _
    $region13: #{simple_mlp_forward.1} parent=1 // pred_fallthru
      _
    // Predicated region
    $region14: #{simple_mlp_forward.1} parent=1 // pred_check
      _
    $region15: #{simple_mlp_forward.1} parent=1 // pred_check_branch
      %42 = sbr.rel (0) target = $region17
    $region16: #{simple_mlp_forward.1} parent=1 // pred_region
      _
    $region17: #{simple_mlp_forward.1} parent=1 // pred_fallthru
      _
    // Predicated region
    $region18: #{simple_mlp_forward.1} parent=1 // pred_check
      _
    $region19: #{simple_mlp_forward.1} parent=1 // pred_check_branch
      %44 = sbr.rel (0) target = $region21
    $region20: #{simple_mlp_forward.1} parent=1 // pred_region
      _
    $region21: #{simple_mlp_forward.1} parent=1 // pred_fallthru
      _
    // Predicated region
    $region22: #{simple_mlp_forward.1} parent=1 // pred_check
      _
    $region23: #{simple_mlp_forward.1} parent=1 // pred_check_branch
      %46 = sbr.rel (0) target = $region25
    $region24: #{simple_mlp_forward.1} parent=1 // pred_region
      _
    $region25: #{simple_mlp_forward.1} parent=1 // pred_fallthru
      _
    // Predicated region
    $region26: #{simple_mlp_forward.1} parent=1 // pred_check
      _
    $region27: #{simple_mlp_forward.1} parent=1 // pred_check_branch
      %48 = sbr.rel (0) target = $region29
    $region28: #{simple_mlp_forward.1} parent=1 // pred_region
      _
    $region29: #{simple_mlp_forward.1} parent=1 // pred_fallthru
      _
    // Predicated region
    $region30: #{simple_mlp_forward.1} parent=1 // pred_check
      _
    $region31: #{simple_mlp_forward.1} parent=1 // pred_check_branch
      %50 = sbr.rel (0) target = $region33
    $region32: #{simple_mlp_forward.1} parent=1 // pred_region
      %52 = dma.done [#allocation3], 128
    $region33: #{simple_mlp_forward.1} parent=1 // pred_fallthru
      _
    // Predicated region
    $region34: #{simple_mlp_forward.1} parent=1 // pred_check
      _
    $region35: #{simple_mlp_forward.1} parent=1 // pred_check_branch
      %54 = sbr.rel (0) target = $region37
    $region36: #{simple_mlp_forward.1} parent=1 // pred_region
      %56 = dma.done [#allocation6], 128
    $region37: #{simple_mlp_forward.1} parent=1 // pred_fallthru
      _
    %v58 = vld [vmem:[#allocation2] sm:$0xff]
    %v59 = vpack.c.bf16 %v58, %v58
    %v60 = vld [vmem:[#allocation5] sm:$0xf]
    %v61 = vld [vmem:[#allocation5 + $0x4] sm:$0xf]
    %v62 = vld [vmem:[%s2] sm:$0x1]
    %v64 = vperm.slane %v62, 0
    %v68 = vunpack.c.l.b16 %v60
    %v69 = vunpack.c.l.b16 %v61
    %v70 = vpack.c.b16 %v69, %v68
    %vm72 = vcmask 130048
    %v74 = vsel %vm72, %v59, 0
    %76 = vmatpush.bf16.msra.mxu0 0
    %77 = vmatpush.bf16.msra.mxu0 0
    %78 = vmatpush.bf16.msra.mxu0 0
    %79 = vmatpush.bf16.msra.mxu0 0
    %80 = vmatpush.bf16.msra.mxu0 0
    %81 = vmatpush.bf16.msra.mxu0 0
    %82 = vmatpush.bf16.msra.mxu0 0
    %83 = vmatpush.bf16.msra.mxu0 %v70
    %84 = vmatmul.bf16.gmra.mxu0 %v74
    %v85 = vpop.f32.mrf.mxu0
    %v86 = vadd.f32 %v64, %v85
    %v87 = vpop.f32.mrf.mxu0
    %88 = vdwg.mxu0
    %v89 = vmax.f32 %v86, 0.0
    %v90 = vpack.c.bf16 %v89, %v89
    %v91 = vld [vmem:[%s3] sm:$0xf]
    %v92 = vld [vmem:[%s3 + $0x4] sm:$0xf]
    %v93 = vld [vmem:[%s3 + $0x8] sm:$0xf]
    %v94 = vld [vmem:[%s3 + $0xc] sm:$0xf]
    %v95 = vld [vmem:[%s3 + $0x10] sm:$0xf]
    %v96 = vld [vmem:[%s3 + $0x14] sm:$0xf]
    %v97 = vld [vmem:[%s3 + $0x18] sm:$0xf]
    %v98 = vld [vmem:[%s3 + $0x1c] sm:$0xf]
    %v99 = vld [vmem:[%s3 + $0x20] sm:$0xf]
    %v100 = vld [vmem:[%s3 + $0x24] sm:$0xf]
    %v101 = vld [vmem:[%s3 + $0x28] sm:$0xf]
    %v102 = vld [vmem:[%s3 + $0x2c] sm:$0xf]
    %v103 = vld [vmem:[%s3 + $0x30] sm:$0xf]
    %v104 = vld [vmem:[%s3 + $0x34] sm:$0xf]
    %v105 = vld [vmem:[%s3 + $0x38] sm:$0xf]
    %v106 = vld [vmem:[%s3 + $0x3c] sm:$0xf]
    %v107 = vld [vmem:[%s4] sm:$0x1]
    %v109 = vperm.slane %v107, 0
    %v127 = vunpack.c.l.b16 %v91
    %v128 = vunpack.c.l.b16 %v92
    %v129 = vunpack.c.l.b16 %v93
    %v130 = vunpack.c.l.b16 %v94
    %v131 = vunpack.c.l.b16 %v95
    %v132 = vunpack.c.l.b16 %v96
    %v133 = vunpack.c.l.b16 %v97
    %v134 = vunpack.c.l.b16 %v98
    %v135 = vunpack.c.l.b16 %v99
    %v136 = vunpack.c.l.b16 %v100
    %v137 = vunpack.c.l.b16 %v101
    %v138 = vunpack.c.l.b16 %v102
    %v139 = vunpack.c.l.b16 %v103
    %v140 = vunpack.c.l.b16 %v104
    %v141 = vunpack.c.l.b16 %v105
    %v142 = vunpack.c.l.b16 %v106
    %v143 = vpack.c.b16 %v128, %v127
    %v144 = vpack.c.b16 %v130, %v129
    %v145 = vpack.c.b16 %v132, %v131
    %v146 = vpack.c.b16 %v134, %v133
    %v147 = vpack.c.b16 %v136, %v135
    %v148 = vpack.c.b16 %v138, %v137
    %v149 = vpack.c.b16 %v140, %v139
    %v150 = vpack.c.b16 %v142, %v141
    %159 = vmatpush.bf16.msra.mxu0 %v150
    %160 = vmatpush.bf16.msra.mxu0 %v149
    %161 = vmatpush.bf16.msra.mxu0 %v148
    %162 = vmatpush.bf16.msra.mxu0 %v147
    %163 = vmatpush.bf16.msra.mxu0 %v146
    %164 = vmatpush.bf16.msra.mxu0 %v145
    %165 = vmatpush.bf16.msra.mxu0 %v144
    %166 = vmatpush.bf16.msra.mxu0 %v143
    %167 = vmatmul.bf16.gmra.mxu0 %v90
    %v168 = vpop.f32.mrf.mxu0
    %v169 = vadd.f32 %v109, %v168
    %v170 = vpop.f32.mrf.mxu0
    %171 = vdwg.mxu0
    %v172 = vmax.f32 %v169, 0.0
    %v173 = vpack.c.bf16 %v172, %v172
    %v174 = vld [vmem:[%s5] sm:$0xf]
    %v175 = vld [vmem:[%s5 + $0x4] sm:$0xf]
    %v176 = vld [vmem:[%s5 + $0x8] sm:$0xf]
    %v177 = vld [vmem:[%s5 + $0xc] sm:$0xf]
    %v178 = vld [vmem:[%s5 + $0x10] sm:$0xf]
    %v179 = vld [vmem:[%s5 + $0x14] sm:$0xf]
    %v180 = vld [vmem:[%s5 + $0x18] sm:$0xf]
    %v181 = vld [vmem:[%s5 + $0x1c] sm:$0xf]
    %v182 = vld [vmem:[%s5 + $0x20] sm:$0xf]
    %v183 = vld [vmem:[%s5 + $0x24] sm:$0xf]
    %v184 = vld [vmem:[%s5 + $0x28] sm:$0xf]
    %v185 = vld [vmem:[%s5 + $0x2c] sm:$0xf]
    %v186 = vld [vmem:[%s5 + $0x30] sm:$0xf]
    %v187 = vld [vmem:[%s5 + $0x34] sm:$0xf]
    %v188 = vld [vmem:[%s5 + $0x38] sm:$0xf]
    %v189 = vld [vmem:[%s5 + $0x3c] sm:$0xf]
    %v190 = vld [vmem:[%s6] sm:$0x1]
    %v192 = vperm.slane %v190, 0
    %v210 = vunpack.c.l.b16 %v174
    %v211 = vunpack.c.l.b16 %v175
    %v212 = vunpack.c.l.b16 %v176
    %v213 = vunpack.c.l.b16 %v177
    %v214 = vunpack.c.l.b16 %v178
    %v215 = vunpack.c.l.b16 %v179
    %v216 = vunpack.c.l.b16 %v180
    %v217 = vunpack.c.l.b16 %v181
    %v218 = vunpack.c.l.b16 %v182
    %v219 = vunpack.c.l.b16 %v183
    %v220 = vunpack.c.l.b16 %v184
    %v221 = vunpack.c.l.b16 %v185
    %v222 = vunpack.c.l.b16 %v186
    %v223 = vunpack.c.l.b16 %v187
    %v224 = vunpack.c.l.b16 %v188
    %v225 = vunpack.c.l.b16 %v189
    %v226 = vpack.c.b16 %v211, %v210
    %v227 = vpack.c.b16 %v213, %v212
    %v228 = vpack.c.b16 %v215, %v214
    %v229 = vpack.c.b16 %v217, %v216
    %v230 = vpack.c.b16 %v219, %v218
    %v231 = vpack.c.b16 %v221, %v220
    %v232 = vpack.c.b16 %v223, %v222
    %v233 = vpack.c.b16 %v225, %v224
    %242 = vmatpush.bf16.msra.mxu0 %v233
    %243 = vmatpush.bf16.msra.mxu0 %v232
    %244 = vmatpush.bf16.msra.mxu0 %v231
    %245 = vmatpush.bf16.msra.mxu0 %v230
    %246 = vmatpush.bf16.msra.mxu0 %v229
    %247 = vmatpush.bf16.msra.mxu0 %v228
    %248 = vmatpush.bf16.msra.mxu0 %v227
    %249 = vmatpush.bf16.msra.mxu0 %v226
    %250 = vmatmul.bf16.gmra.mxu0 %v173
    %v251 = vpop.f32.mrf.mxu0
    %v252 = vadd.f32 %v192, %v251
    %v253 = vpop.f32.mrf.mxu0
    %254 = vdwg.mxu0
    %v255 = vxor.u32 %v252, 2147483648
    %v256 = vmul.f32 %v255, 1.442695
    %v257 = vpow.pop %v256
    %v258 = vadd.f32 %v257, 1.0
    %v259 = vrcp.pop %v258
    %v260 = vmul.f32 %v258, %v259
    %v261 = vsub.f32 1.0, %v260
    %v262 = vmul.f32 %v259, %v261
    %v263 = vadd.f32 %v259, %v262
    %vm264 = vweird.f32 %v258
    %vm265 = vweird.f32 %v259
    %vm266 = vmor %vm264, %vm265
    %v267 = vsel %vm266, %v259, %v263
    %v268 = vand.u32 2147483647, %v258
    %vm269 = vcmp.eq.f32.partialorder %v268, 8.507059e+37
    %v270 = vand.u32 %v258, 2147483648
    %v271 = vor.u32 1.1754944e-38, %v270
    %v272 = vsel %vm269, %v271, %v267
    %v273 = vmul.f32 1.0, %v272
    %vm274 = vcmask 31744
    %275 = vst.msk [vmem:[#allocation7] sm:$0xff] %vm274, %v273
    // Predicated region
    $region38: #{simple_mlp_forward.1} parent=1 // pred_check
      _
    $region39: #{simple_mlp_forward.1} parent=1 // pred_check_branch
      %277 = sbr.rel (0) target = $region41
    $region40: #{simple_mlp_forward.1} parent=1 // pred_region
      %279 = vsyncadd [#allocation4], 0
      %s281 = sshll.u32 [#allocation7], 4
      %s282 = int_to_ptr.vmem [resolvable:$true] %s281
      %s283 = sshll.u32 %s7, 4
      %s284 = int_to_ptr.hbm [resolvable:$true] %s283
      %286 = dma.vmem_to_hbm [thread:$0]  %s282, 128, %s284, [#allocation4]
    $region41: #{simple_mlp_forward.1} parent=1 // pred_fallthru
      _
    // Predicated region
    $region42: #{simple_mlp_forward.1} parent=1 // pred_check
      _
    $region43: #{simple_mlp_forward.1} parent=1 // pred_check_branch
      %288 = sbr.rel (0) target = $region45
    $region44: #{simple_mlp_forward.1} parent=1 // pred_region
      %290 = dma.done [#allocation4], 128
    $region45: #{simple_mlp_forward.1} parent=1 // pred_fallthru
      _
    %291 = vsyncpa [#allocation3], 1
    %292 = vsyncpa [#allocation6], 1
    %293 = vsyncpa [#allocation4], 1

</llo_original>
